<compile_context>
chip_gen: v5e
topology: v5e:2x2
jax: 0.10.0
libtpu: 0.0.40
codegen_flags: <defaults>
</compile_context>

<pallas_src>
import numpy as np
import jax
import jax.numpy as jnp
from jax.experimental import pallas as pl
from jax.experimental.pallas import tpu as pltpu

_OUT = 7  # output spatial size of the dvf grid (7x7)


# ---------------------------------------------------------------------------
# Static Catmull-Rom tap weights
# ---------------------------------------------------------------------------
def _catmull_rom_matrix(in_size: int, out_size: int) -> np.ndarray:
    """W (out_size, in_size) s.t. out = W @ in reproduces bicubic_interp_2d's 1-D
    Hermite/Catmull-Rom interpolation with f = j * in/out (endpoint=False) and
    border-clipped taps."""
    f = np.arange(out_size, dtype=np.float64) * (in_size / out_size)
    i0 = np.floor(f).astype(np.int64)
    t = f - i0
    wA = -0.5 * t**3 + t**2 - 0.5 * t
    wB = 1.5 * t**3 - 2.5 * t**2 + 1.0
    wC = -1.5 * t**3 + 2.0 * t**2 + 0.5 * t
    wD = 0.5 * t**3 - 0.5 * t**2
    W = np.zeros((out_size, in_size), dtype=np.float64)
    for off, w in zip((-1, 0, 1, 2), (wA, wB, wC, wD)):
        idx = np.clip(i0 + off, 0, in_size - 1)
        for j in range(out_size):
            W[j, idx[j]] += w[j]
    return W.astype(np.float32)


def _combined_weight(H: int, W: int, oh: int, ow: int) -> np.ndarray:
    """Wc (H*W, oh*ow): dvf[n,i,j,c] = sum_{b,a} x[n,c,b,a] * Wc[b*W+a, i*ow+j].

    Axis roles follow x.permute(0,3,2,1): the interpolation's "row" axis is the
    original W and its "column" axis is the original H (weight roles swapped so
    no data transpose is needed)."""
    Wy = _catmull_rom_matrix(W, oh)   # (oh, W) -- taps over original W axis
    Wx = _catmull_rom_matrix(H, ow)   # (ow, H) -- taps over original H axis
    # Wc[(b, a), (i, j)] = Wy[i, a] * Wx[j, b]
    return np.einsum("ia,jb->baij", Wy, Wx).reshape(H * W, oh * ow)


# ---------------------------------------------------------------------------
# Pallas kernel
# ---------------------------------------------------------------------------
def _dvf_kernel(x_ref, w_ref, o_ref):
    # x_ref: (TB, H*W) input rows (input dtype), w_ref: (H*W, OC) f32 taps,
    # o_ref: (TB, OC) output rows in the compute dtype.
    x = x_ref[...].astype(jnp.float32)     # explicit upcast; f32 taps stay exact
    o_ref[...] = jnp.dot(
        x, w_ref[...], preferred_element_type=jnp.float32
    ).astype(o_ref.dtype)


# ---------------------------------------------------------------------------
# Tiling heuristics
# ---------------------------------------------------------------------------
def _tile_params():
    """(target_input_block_bytes, min_grid_steps) per TPU generation."""
    try:
        kind = jax.devices()[0].device_kind.lower()
    except Exception:  # pragma: no cover - defensive
        kind = ""
    if "v7" in kind:
        # 3.2 TB/s HBM: 8 MiB blocks hide the ~0.35us per-step overhead; 2 TCs
        # share the "parallel" axis -> want >= 2 steps per core.
        return 8 << 20, 4
    if "v6" in kind:
        return 4 << 20, 2
    # v5e / unknown: 2 MiB blocks double-buffered stay inside the 16 MiB
    # default scoped-VMEM limit with plenty of headroom.
    return 2 << 20, 2


def _choose_block_rows(B: int, row_bytes: int, itemsize: int,
                       target_bytes: int, min_steps: int) -> int:
    """Rows (batch*channel) per grid step: ~target_bytes input blocks, rounded
    to the dtype-aware sublane-packing quantum, while guaranteeing min_steps
    grid steps whenever B is large enough to split cleanly."""
    quant = {4: 8, 2: 16, 1: 32}.get(itemsize, 8)   # f32 / bf16 / int8-fp8
    tb = max(1, target_bytes // max(1, row_bytes))
    # Relax the step requirement for tiny B rather than dropping below `quant`.
    steps = min_steps
    while steps > 1 and B < steps * quant:
        steps //= 2
    if steps > 1:
        tb = min(tb, B // steps)
    if tb >= B:
        return B
    return min(B, max(quant, (tb // quant) * quant))


# ---------------------------------------------------------------------------
# Wrapper
# ---------------------------------------------------------------------------
def bicubic_dvf_pallas(x: jax.Array, out_size=(_OUT, _OUT),
                       downcast_to_bf16: bool = False) -> jax.Array:
    """x: (N, C, H, W) NCHW -> dvf (N, out_h, out_w, C), matching
    bicubic_interp_2d_t(x.permute(0, 3, 2, 1), out_size)."""
    N, C, H, W = x.shape
    oh, ow = out_size
    out_hw = oh * ow
    B = N * C

    # Stream bf16 inputs as bf16 (halves HBM traffic on this bandwidth-bound
    # kernel); everything else streams as f32.  Optional caller-approved
    # downcast of f32 inputs to bf16 (f32 accumulation is used regardless).
    if x.dtype == jnp.bfloat16:
        cdtype = jnp.bfloat16
    elif downcast_to_bf16 and x.dtype == jnp.float32:
        cdtype = jnp.bfloat16
    else:
        cdtype = jnp.float32
    xf = x.reshape(B, H * W).astype(cdtype)       # free reshape of the NCHW buffer
    in_itemsize = jnp.dtype(cdtype).itemsize
    out_itemsize = jnp.dtype(cdtype).itemsize

    # Lane-dense output: pad the 49 output taps up to a multiple of 128 lanes,
    # but only when the padded output row stays <= 25% of the input row bytes
    # (otherwise the extra HBM writeback outweighs the unmasked-store win and
    # the input DMA fully covers the tiny masked store path anyway).
    pad_cols = ((out_hw + 127) // 128) * 128
    if out_hw % 128 != 0 and pad_cols * out_itemsize * 4 <= H * W * in_itemsize:
        out_cols = pad_cols
    else:
        out_cols = out_hw

    # Tap weights always in f32 (no bf16 quantization of the Catmull-Rom taps).
    wc_np = _combined_weight(H, W, oh, ow)
    if out_cols != out_hw:
        wc_np = np.pad(wc_np, ((0, 0), (0, out_cols - out_hw)))
    wc = jnp.asarray(wc_np, dtype=jnp.float32)
    # TODO(synk): for very large fields (H*W in the tens of thousands) tile Wc
    # along H*W with an accumulator grid axis and single-buffer the
    # loop-invariant weight; dvf inputs are small, so the single-shot fused
    # weight (and its default double buffer) is kept for simplicity.

    target_bytes, min_steps = _tile_params()
    tb = _choose_block_rows(B, H * W * in_itemsize, in_itemsize,
                            target_bytes, min_steps)
    grid = (pl.cdiv(B, tb),)

    out = pl.pallas_call(
        _dvf_kernel,
        out_shape=jax.ShapeDtypeStruct((B, out_cols), cdtype),
        grid_spec=pltpu.PrefetchScalarGridSpec(
            num_scalar_prefetch=0,
            grid=grid,
            in_specs=[
                pl.BlockSpec((tb, H * W), lambda i: (i, 0)),
                pl.BlockSpec((H * W, out_cols), lambda i: (0, 0)),  # loop-invariant taps
            ],
            out_specs=pl.BlockSpec((tb, out_cols), lambda i: (i, 0)),
        ),
        compiler_params=pltpu.CompilerParams(
            dimension_semantics=("parallel",)),
    )(xf, wc)

    # Tiny (N*C*49-element) relayout; safe to do in plain JAX.
    dvf = out[:, :out_hw].reshape(N, C, oh, ow).transpose(0, 2, 3, 1)  # (N, oh, ow, C)
    if dvf.dtype != x.dtype and not downcast_to_bf16:
        dvf = dvf.astype(x.dtype)            # no-op for f32 / bf16 inputs
    return dvf


class WarpImagePyTorchBicubicDvf:
    """JAX/Pallas equivalent of warpImage_pyTorchBicubic_dvf.forward
    (NCHW in, (N, 7, 7, C) out).  No trainable parameters."""

    def __init__(self, out_size=(_OUT, _OUT)):
        self.out_size = tuple(out_size)

    def __call__(self, x: jax.Array) -> jax.Array:
        return bicubic_dvf_pallas(x, self.out_size)


# ---------------------------------------------------------------------------
# References (sanity checks)
# ---------------------------------------------------------------------------
def _reference(x: jax.Array, out_size=(_OUT, _OUT)) -> jax.Array:
    """Matrix-form pure-JAX reference of the same forward."""
    x1 = jnp.transpose(x, (0, 3, 2, 1)).astype(jnp.float32)   # (N, W, H, C) as NHWC
    _, h1, w1, _ = x1.shape
    Wy = jnp.asarray(_catmull_rom_matrix(h1, out_size[0]))
    Wx = jnp.asarray(_catmull_rom_matrix(w1, out_size[1]))
    return jnp.einsum("ih,jw,nhwc->nijc", Wy, Wx, x1)


def _direct_reference(x_np: np.ndarray, out_size=(_OUT, _OUT)) -> np.ndarray:
    """Gather-based NumPy re-implementation of bicubic_interp_2d_t applied to
    x.permute(0,3,2,1); independent of the combined-weight-matrix construction
    (validates the axis-swap for non-square H != W inputs)."""
    x1 = np.transpose(np.asarray(x_np, dtype=np.float64), (0, 3, 2, 1))  # (N, W, H, C)
    N, h1, w1, C = x1.shape
    oh, ow = out_size

    def taps(in_size, osz):
        f = np.arange(osz, dtype=np.float64) * (in_size / osz)
        i0 = np.floor(f).astype(np.int64)
        t = f - i0
        w = np.stack([-0.5 * t**3 + t**2 - 0.5 * t,
                      1.5 * t**3 - 2.5 * t**2 + 1.0,
                      -1.5 * t**3 + 2.0 * t**2 + 0.5 * t,
                      0.5 * t**3 - 0.5 * t**2], axis=0)          # (4, osz)
        idx = np.stack([np.clip(i0 + o, 0, in_size - 1)
                        for o in (-1, 0, 1, 2)], axis=0)          # (4, osz)
        return w, idx

    wy, iy = taps(h1, oh)
    wx, ix = taps(w1, ow)
    out = np.zeros((N, oh, ow, C), dtype=np.float64)
    for p in range(4):
        for q in range(4):
            g = x1[:, iy[p]][:, :, ix[q]]                         # (N, oh, ow, C)
            out += wy[p][None, :, None, None] * wx[q][None, None, :, None] * g
    return out.astype(np.float32)


if __name__ == "__main__":
    key = jax.random.PRNGKey(0)
    model = WarpImagePyTorchBicubicDvf()

    # 1) Small square f32 input (N=2, C=4, H=W=16).
    k1, k2, k3 = jax.random.split(key, 3)
    x = jax.random.normal(k1, (2, 4, 16, 16), dtype=jnp.float32)
    dvf = jax.block_until_ready(model(x))
    assert dvf.shape == (2, 7, 7, 4), dvf.shape
    ref = jax.block_until_ready(_reference(x))
    assert jnp.allclose(dvf, ref, atol=1e-4, rtol=1e-4), float(
        jnp.max(jnp.abs(dvf.astype(jnp.float32) - ref)))
    ref2 = _direct_reference(np.asarray(x))
    assert np.allclose(np.asarray(dvf, dtype=np.float32), ref2,
                       atol=1e-4, rtol=1e-4)

    # 2) Non-square input (H=12 != W=20) checked against the independent
    #    gather-based reference to rule out an axis mix-up.
    xns = jax.random.normal(k2, (2, 3, 12, 20), dtype=jnp.float32)
    dvf_ns = jax.block_until_ready(model(xns))
    assert dvf_ns.shape == (2, 7, 7, 3), dvf_ns.shape
    ref_ns = _direct_reference(np.asarray(xns))
    assert np.allclose(np.asarray(dvf_ns, dtype=np.float32), ref_ns,
                       atol=1e-4, rtol=1e-4)

    # 3) Larger spatial field (exercises the lane-dense 128-column output path)
    #    plus a bf16 input (exercises bf16 streaming + bf16 output).
    xl = jax.random.normal(k3, (1, 2, 64, 64), dtype=jnp.float32)
    dvf_l = jax.block_until_ready(model(xl))
    ref_l = _direct_reference(np.asarray(xl))
    assert np.allclose(np.asarray(dvf_l, dtype=np.float32), ref_l,
                       atol=1e-4, rtol=1e-4)

    xb = x.astype(jnp.bfloat16)
    dvf_b = jax.block_until_ready(model(xb))
    assert dvf_b.dtype == jnp.bfloat16, dvf_b.dtype
    ref_b = jax.block_until_ready(_reference(xb))   # f32 math on the quantized input
    assert jnp.allclose(dvf_b.astype(jnp.float32), ref_b, atol=1e-2, rtol=1e-2)

    print("KERNEL_OK")
</pallas_src>

<mosaic_0001>
module attributes {stable_mosaic.version = 11 : i64} {
  func.func @_dvf_kernel(%arg0: i32, %arg1: memref<8x256xf32, #tpu.memory_space<vmem>>, %arg2: memref<256x49xf32, #tpu.memory_space<vmem>>, %arg3: memref<8x49xf32, #tpu.memory_space<vmem>>) attributes {dimension_semantics = [#tpu.dimension_semantics<parallel>], iteration_bounds = array<i64: 1>, scalar_prefetch = 0 : i64, scratch_operands = 0 : i64, tpu.core_type = #tpu.core_type<tc>, window_params = [{transform_indices = @transform_0, window_bounds = array<i64: 8, 256>}, {pipeline_mode = #tpu.pipeline_mode<synchronous>, transform_indices = @transform_1, window_bounds = array<i64: 256, 49>}, {transform_indices = @transform_2, window_bounds = array<i64: 8, 49>}]} {
    %c0 = arith.constant 0 : index
    %c0_0 = arith.constant 0 : index
    %0 = vector.load %arg1[%c0, %c0_0] : memref<8x256xf32, #tpu.memory_space<vmem>>, vector<8x256xf32>
    %c0_1 = arith.constant 0 : index
    %c0_2 = arith.constant 0 : index
    %1 = vector.load %arg2[%c0_1, %c0_2] : memref<256x49xf32, #tpu.memory_space<vmem>>, vector<256x49xf32>
    %cst = arith.constant dense<0.000000e+00> : vector<8x49xf32>
    %2 = tpu.matmul %0, %1, %cst {dimension_numbers = #tpu.dot_dimension_numbers<[1], [0], [0], [1], [0, 0, 1, 1], [], []>} : vector<8x256xf32>, vector<256x49xf32>, vector<8x49xf32> -> vector<8x49xf32>
    %c0_3 = arith.constant 0 : index
    %c0_4 = arith.constant 0 : index
    %3 = vector.load %arg3[%c0_3, %c0_4] : memref<8x49xf32, #tpu.memory_space<vmem>>, vector<8x49xf32>
    tpu.vector_store %arg3[%c0_3, %c0_4], %2 {strides = array<i32>} : memref<8x49xf32, #tpu.memory_space<vmem>>, vector<8x49xf32>,
    return
  }
  func.func @transform_0(%arg0: i32) -> (i32, i32) {
    %c0_i32 = arith.constant 0 : i32
    %c0_i32_0 = arith.constant 0 : i32
    return %arg0, %c0_i32 : i32, i32
  }
  func.func @transform_1(%arg0: i32) -> (i32, i32) {
    %c0_i32 = arith.constant 0 : i32
    %c0_i32_0 = arith.constant 0 : i32
    %c0_i32_1 = arith.constant 0 : i32
    return %c0_i32, %c0_i32_0 : i32, i32
  }
  func.func @transform_2(%arg0: i32) -> (i32, i32) {
    %c0_i32 = arith.constant 0 : i32
    %c0_i32_0 = arith.constant 0 : i32
    return %arg0, %c0_i32 : i32, i32
  }
}

</mosaic_0001>

<llo_original>
// kernel: tpu_custom_call.1
$region0: #{tpu_custom_call.1}
  #allocation0 [shape = 'u32[]', space=smem, size = 0x4, offset = 0x4, fixed_abs, tag = 'smem constant byte address 0x4 - core index']
  #allocation1 [shape = 'u32[72,128]{1,0:T(1,128)}', space=vmem, size = 0x9000, scoped, tag = 'internal scratch']
  %s0 = inlined_call_operand.vmem [shape: f32[8,256], index: 0, kind: input, shape index: {}]
  %s1 = inlined_call_operand.vmem [shape: f32[256,49], index: 1, kind: input, shape index: {}]
  %s2 = inlined_call_operand.hbm [shape: f32[8,49], index: 2, kind: output, shape index: {}]
  %s3 = sld [smem:[#allocation0]]
  $region18: #{tpu_custom_call.1} parent=0
    _
  %s5 = ssub.s32 1, %s3
  %s6 = scalar_select 0, %s5, %s3
  $region1: #{tpu_custom_call.1} parent=0
    #allocation2 [shape = 'u8[4096]{0}', space=vmem, size = 0x1000, scoped, tag = 'output window, operand 0, single buffered']
    #allocation3 [shape = 's32[1]{0}', space=sflag, size = 0x4, scoped, tag = 'scoped memory for tpu_custom_call.1']
    %7 = vsyncpa [#allocation3], 0
    // Predicated region
    $region2: #{tpu_custom_call.1} parent=1 // pred_check
      _
    $region3: #{tpu_custom_call.1} parent=1 // pred_check_branch
      %9 = sbr.rel (0) target = $region5
    $region4: #{tpu_custom_call.1} parent=1 // pred_region
      _
    $region5: #{tpu_custom_call.1} parent=1 // pred_fallthru
      _
    // Predicated region
    $region6: #{tpu_custom_call.1} parent=1 // pred_check
      _
    $region7: #{tpu_custom_call.1} parent=1 // pred_check_branch
      %11 = sbr.rel (0) target = $region9
    $region8: #{tpu_custom_call.1} parent=1 // pred_region
      _
    $region9: #{tpu_custom_call.1} parent=1 // pred_fallthru
      _
    %v12 = vld [vmem:[%s0] sm:$0xff]
    %v13 = vld [vmem:[%s0 + $0x8] sm:$0xff]
    %v14 = vld [vmem:[%s1] sm:$0xff]
    %v15 = vld [vmem:[%s1 + $0x8] sm:$0xff]
    %v16 = vld [vmem:[%s1 + $0x10] sm:$0xff]
    %v17 = vld [vmem:[%s1 + $0x18] sm:$0xff]
    %v18 = vld [vmem:[%s1 + $0x20] sm:$0xff]
    %v19 = vld [vmem:[%s1 + $0x28] sm:$0xff]
    %v20 = vld [vmem:[%s1 + $0x30] sm:$0xff]
    %v21 = vld [vmem:[%s1 + $0x38] sm:$0xff]
    %v22 = vld [vmem:[%s1 + $0x40] sm:$0xff]
    %v23 = vld [vmem:[%s1 + $0x48] sm:$0xff]
    %v24 = vld [vmem:[%s1 + $0x50] sm:$0xff]
    %v25 = vld [vmem:[%s1 + $0x58] sm:$0xff]
    %v26 = vld [vmem:[%s1 + $0x60] sm:$0xff]
    %v27 = vld [vmem:[%s1 + $0x68] sm:$0xff]
    %v28 = vld [vmem:[%s1 + $0x70] sm:$0xff]
    %v29 = vld [vmem:[%s1 + $0x78] sm:$0xff]
    %v30 = vld [vmem:[%s1 + $0x80] sm:$0xff]
    %v31 = vld [vmem:[%s1 + $0x88] sm:$0xff]
    %v32 = vld [vmem:[%s1 + $0x90] sm:$0xff]
    %v33 = vld [vmem:[%s1 + $0x98] sm:$0xff]
    %v34 = vld [vmem:[%s1 + $0xa0] sm:$0xff]
    %v35 = vld [vmem:[%s1 + $0xa8] sm:$0xff]
    %v36 = vld [vmem:[%s1 + $0xb0] sm:$0xff]
    %v37 = vld [vmem:[%s1 + $0xb8] sm:$0xff]
    %v38 = vld [vmem:[%s1 + $0xc0] sm:$0xff]
    %v39 = vld [vmem:[%s1 + $0xc8] sm:$0xff]
    %v40 = vld [vmem:[%s1 + $0xd0] sm:$0xff]
    %v41 = vld [vmem:[%s1 + $0xd8] sm:$0xff]
    %v42 = vld [vmem:[%s1 + $0xe0] sm:$0xff]
    %v43 = vld [vmem:[%s1 + $0xe8] sm:$0xff]
    %v44 = vld [vmem:[%s1 + $0xf0] sm:$0xff]
    %v45 = vld [vmem:[%s1 + $0xf8] sm:$0xff]
    %46 = vmatpush.msra.mxu0 %v29
    %47 = vmatpush.msra.mxu0 %v28
    %48 = vmatpush.msra.mxu0 %v27
    %49 = vmatpush.msra.mxu0 %v26
    %50 = vmatpush.msra.mxu0 %v25
    %51 = vmatpush.msra.mxu0 %v24
    %52 = vmatpush.msra.mxu0 %v23
    %53 = vmatpush.msra.mxu0 %v22
    %54 = vmatpush.msra.mxu0 %v21
    %55 = vmatpush.msra.mxu0 %v20
    %56 = vmatpush.msra.mxu0 %v19
    %57 = vmatpush.msra.mxu0 %v18
    %58 = vmatpush.msra.mxu0 %v17
    %59 = vmatpush.msra.mxu0 %v16
    %60 = vmatpush.msra.mxu0 %v15
    %61 = vmatpush.msra.mxu0 %v14
    %62 = vmatmul.f32.gmra.mxu0 %v12
    %v63 = vpop.f32.mrf.mxu0
    %v64 = vadd.f32 0.0, %v63
    %65 = vdwg.mxu0
    %66 = vmatpush.msra.mxu0 %v45
    %67 = vmatpush.msra.mxu0 %v44
    %68 = vmatpush.msra.mxu0 %v43
    %69 = vmatpush.msra.mxu0 %v42
    %70 = vmatpush.msra.mxu0 %v41
    %71 = vmatpush.msra.mxu0 %v40
    %72 = vmatpush.msra.mxu0 %v39
    %73 = vmatpush.msra.mxu0 %v38
    %74 = vmatpush.msra.mxu0 %v37
    %75 = vmatpush.msra.mxu0 %v36
    %76 = vmatpush.msra.mxu0 %v35
    %77 = vmatpush.msra.mxu0 %v34
    %78 = vmatpush.msra.mxu0 %v33
    %79 = vmatpush.msra.mxu0 %v32
    %80 = vmatpush.msra.mxu0 %v31
    %81 = vmatpush.msra.mxu0 %v30
    %82 = vmatmul.f32.gmra.mxu0 %v13
    %v83 = vpop.f32.mrf.mxu0
    %v84 = vadd.f32 %v64, %v83
    %85 = vdwg.mxu0
    %vm86 = vcmask 400384
    %87 = vst.msk [vmem:[#allocation2] sm:$0xff] %vm86, %v84
    // Predicated region
    $region10: #{tpu_custom_call.1} parent=1 // pred_check
      _
    $region11: #{tpu_custom_call.1} parent=1 // pred_check_branch
      %89 = sbr.rel (0) target = $region13
    $region12: #{tpu_custom_call.1} parent=1 // pred_region
      %91 = vsyncadd [#allocation3], 0
      %s93 = sshll.u32 [#allocation2], 4
      %s94 = int_to_ptr.vmem [resolvable:$true] %s93
      %s95 = sshll.u32 %s2, 4
      %s96 = int_to_ptr.hbm [resolvable:$true] %s95
      %98 = dma.vmem_to_hbm [thread:$0]  %s94, 128, %s96, [#allocation3]
    $region13: #{tpu_custom_call.1} parent=1 // pred_fallthru
      _
    // Predicated region
    $region14: #{tpu_custom_call.1} parent=1 // pred_check
      _
    $region15: #{tpu_custom_call.1} parent=1 // pred_check_branch
      %100 = sbr.rel (0) target = $region17
    $region16: #{tpu_custom_call.1} parent=1 // pred_region
      %102 = dma.done [#allocation3], 128
    $region17: #{tpu_custom_call.1} parent=1 // pred_fallthru
      _
    %103 = vsyncpa [#allocation3], 1

</llo_original>
